<compile_context>
chip_gen: v5e
topology: v5e:2x2
jax: 0.10.0
libtpu: 0.0.40
codegen_flags: <defaults>
</compile_context>

<pallas_src>
import jax
import jax.numpy as jnp
from jax.experimental import pallas as pl
from jax.experimental.pallas import tpu as pltpu

EPS = 1e-5
H1, H2 = 400, 300                 # logical hidden sizes (PyTorch module)
H1P, H2P, OUTP = 512, 384, 128    # lane-padded sizes used by the kernel


def _round_up(x, m):
    return (x + m - 1) // m * m


# ---------------------------------------------------------------------------
# Kernel: one batch tile per grid step; BatchNorm already folded into W / b.
# ---------------------------------------------------------------------------
def critic_kernel(xs_ref, xa_ref,
                  w1s_ref, w1a_ref, b1_ref,
                  w2_ref, b2_ref,
                  w3_ref, b3_ref,
                  o_ref):
    # ---- Linear(S+A, 512) [BN folded] + ReLU  (Dropout = identity, eval) ----
    h1 = (jnp.dot(xs_ref[...], w1s_ref[...], preferred_element_type=jnp.float32)
          + jnp.dot(xa_ref[...], w1a_ref[...], preferred_element_type=jnp.float32)
          + b1_ref[...])
    h1 = jnp.maximum(h1, 0.0)

    # ---- Linear(512, 384) [BN folded] + ReLU  (Dropout = identity, eval) ----
    h2 = jnp.dot(h1, w2_ref[...], preferred_element_type=jnp.float32) + b2_ref[...]
    h2 = jnp.maximum(h2, 0.0)

    # ---- Linear(384, 128) (real output in lane 0) ----
    o_ref[...] = (jnp.dot(h2, w3_ref[...], preferred_element_type=jnp.float32)
                  + b3_ref[...]).astype(o_ref.dtype)


# ---------------------------------------------------------------------------
# Parameter prep: fold BN, zero-pad to lane-dense shapes, cast weights bf16.
# ---------------------------------------------------------------------------
def prepare_params(p, state_dim, action_dim, weight_dtype=jnp.bfloat16):
    f32 = jnp.float32

    s1 = p["g1"] * jax.lax.rsqrt(p["v1"] + EPS)          # (1, 400)
    w1 = p["w1"] * s1                                    # (S+A, 400)
    b1 = (p["b1"] - p["m1"]) * s1 + p["be1"]             # (1, 400)

    s2 = p["g2"] * jax.lax.rsqrt(p["v2"] + EPS)          # (1, 300)
    w2 = p["w2"] * s2                                    # (400, 300)
    b2 = (p["b2"] - p["m2"]) * s2 + p["be2"]             # (1, 300)

    din = state_dim + action_dim
    w1p = jnp.zeros((din, H1P), f32).at[:, :H1].set(w1)
    b1p = jnp.zeros((1, H1P), f32).at[:, :H1].set(b1)
    w2p = jnp.zeros((H1P, H2P), f32).at[:H1, :H2].set(w2)
    b2p = jnp.zeros((1, H2P), f32).at[:, :H2].set(b2)
    w3p = jnp.zeros((H2P, OUTP), f32).at[:H2, :1].set(p["w3"])
    b3p = jnp.zeros((1, OUTP), f32).at[:, :1].set(p["b3"])

    wd = weight_dtype
    return dict(
        w1s=w1p[:state_dim].astype(wd),      # (S, 512)
        w1a=w1p[state_dim:].astype(wd),      # (A, 512)
        b1=b1p,                              # (1, 512) f32
        w2=w2p.astype(wd),                   # (512, 384)
        b2=b2p,                              # (1, 384) f32
        w3=w3p.astype(wd),                   # (384, 128)
        b3=b3p,                              # (1, 128) f32
    )


# ---------------------------------------------------------------------------
# Wrapper
# ---------------------------------------------------------------------------
def critic_forward(state, action, kp, tile_b=None):
    """state: (B, S), action: (B, A); kp = prepare_params(...). Returns (B, 1)."""
    B, S = state.shape
    A = action.shape[1]

    if tile_b is None:
        # 256 matches the 2x256^2 MXU on v6e/v7x; small batches use one tile.
        tile_b = min(256, _round_up(B, 8))
    Bp = _round_up(B, tile_b)

    xs = state.astype(jnp.float32)
    xa = action.astype(jnp.float32)
    if Bp != B:
        xs = jnp.zeros((Bp, S), jnp.float32).at[:B].set(xs)
        xa = jnp.zeros((Bp, A), jnp.float32).at[:B].set(xa)

    def batch_map(i):
        return (i, 0)

    def const_map(i):
        return (0, 0)

    weights = (kp["w1s"], kp["w1a"], kp["b1"], kp["w2"], kp["b2"],
               kp["w3"], kp["b3"])

    in_specs = [pl.BlockSpec((tile_b, S), batch_map),
                pl.BlockSpec((tile_b, A), batch_map)]
    # Constant block index -> weights stay VMEM-resident across grid steps.
    in_specs += [pl.BlockSpec(w.shape, const_map) for w in weights]

    out = pl.pallas_call(
        critic_kernel,
        out_shape=jax.ShapeDtypeStruct((Bp, OUTP), jnp.float32),
        grid=(Bp // tile_b,),
        in_specs=in_specs,
        out_specs=pl.BlockSpec((tile_b, OUTP), batch_map),
        compiler_params=pltpu.CompilerParams(
            dimension_semantics=("parallel",),
        ),
    )(xs, xa, *weights)

    return out[:B, :1]


# ---------------------------------------------------------------------------
# Parameter init (PyTorch-Linear-like uniform bounds) and pure-JAX reference.
# ---------------------------------------------------------------------------
def init_params(key, state_dim, action_dim):
    din = state_dim + action_dim
    ks = jax.random.split(key, 6)

    def lin(kw, kb, fan_in, fan_out):
        bound = 1.0 / jnp.sqrt(fan_in)
        w = jax.random.uniform(kw, (fan_in, fan_out), jnp.float32, -bound, bound)
        b = jax.random.uniform(kb, (1, fan_out), jnp.float32, -bound, bound)
        return w, b

    w1, b1 = lin(ks[0], ks[1], din, H1)
    w2, b2 = lin(ks[2], ks[3], H1, H2)
    w3, b3 = lin(ks[4], ks[5], H2, 1)

    return dict(
        w1=w1, b1=b1,
        g1=jnp.ones((1, H1), jnp.float32), be1=jnp.zeros((1, H1), jnp.float32),
        m1=jnp.zeros((1, H1), jnp.float32), v1=jnp.ones((1, H1), jnp.float32),
        w2=w2, b2=b2,
        g2=jnp.ones((1, H2), jnp.float32), be2=jnp.zeros((1, H2), jnp.float32),
        m2=jnp.zeros((1, H2), jnp.float32), v2=jnp.ones((1, H2), jnp.float32),
        w3=w3, b3=b3,
    )


def critic_reference(state, action, p):
    """Pure-JAX eval-mode reference with the original (unfolded, f32) params."""
    hp = jax.lax.Precision.HIGHEST
    x = jnp.concatenate([state, action], axis=1).astype(jnp.float32)
    h = jnp.dot(x, p["w1"], precision=hp) + p["b1"]
    h = (h - p["m1"]) * jax.lax.rsqrt(p["v1"] + EPS) * p["g1"] + p["be1"]
    h = jnp.maximum(h, 0.0)
    h = jnp.dot(h, p["w2"], precision=hp) + p["b2"]
    h = (h - p["m2"]) * jax.lax.rsqrt(p["v2"] + EPS) * p["g2"] + p["be2"]
    h = jnp.maximum(h, 0.0)
    return jnp.dot(h, p["w3"], precision=hp) + p["b3"]


if __name__ == "__main__":
    key = jax.random.PRNGKey(0)
    k_s, k_a, k_p, k_s2, k_a2 = jax.random.split(key, 5)

    batch, state_dim, action_dim = 8, 16, 16
    state = jax.random.normal(k_s, (batch, state_dim), jnp.float32)
    action = jax.random.normal(k_a, (batch, action_dim), jnp.float32)

    params = init_params(k_p, state_dim, action_dim)
    kparams = prepare_params(params, state_dim, action_dim)

    # Single-tile case.
    out = jax.block_until_ready(critic_forward(state, action, kparams))
    ref = critic_reference(state, action, params)
    assert out.shape == (batch, 1)
    # bf16 weights -> slightly looser tolerance vs the f32 reference.
    assert jnp.allclose(out, ref, atol=2e-2, rtol=2e-2), "mismatch vs reference"

    # Multi-step grid + ragged-batch padding case.
    b2 = 40
    state2 = jax.random.normal(k_s2, (b2, state_dim), jnp.float32)
    action2 = jax.random.normal(k_a2, (b2, action_dim), jnp.float32)
    out2 = jax.block_until_ready(critic_forward(state2, action2, kparams, tile_b=16))
    ref2 = critic_reference(state2, action2, params)
    assert out2.shape == (b2, 1)
    assert jnp.allclose(out2, ref2, atol=2e-2, rtol=2e-2), "mismatch vs reference (tiled)"

    print("KERNEL_OK")
</pallas_src>

<mosaic_0001>
module attributes {stable_mosaic.version = 11 : i64} {
  func.func @critic_kernel(%arg0: i32, %arg1: memref<8x16xf32, #tpu.memory_space<vmem>>, %arg2: memref<8x16xf32, #tpu.memory_space<vmem>>, %arg3: memref<16x512xbf16, #tpu.memory_space<vmem>>, %arg4: memref<16x512xbf16, #tpu.memory_space<vmem>>, %arg5: memref<1x512xf32, #tpu.memory_space<vmem>>, %arg6: memref<512x384xbf16, #tpu.memory_space<vmem>>, %arg7: memref<1x384xf32, #tpu.memory_space<vmem>>, %arg8: memref<384x128xbf16, #tpu.memory_space<vmem>>, %arg9: memref<1x128xf32, #tpu.memory_space<vmem>>, %arg10: memref<8x128xf32, #tpu.memory_space<vmem>>) attributes {dimension_semantics = [#tpu.dimension_semantics<parallel>], iteration_bounds = array<i64: 1>, scalar_prefetch = 0 : i64, scratch_operands = 0 : i64, tpu.core_type = #tpu.core_type<tc>, window_params = [{transform_indices = @transform_0, window_bounds = array<i64: 8, 16>}, {transform_indices = @transform_1, window_bounds = array<i64: 8, 16>}, {pipeline_mode = #tpu.pipeline_mode<synchronous>, transform_indices = @transform_2, window_bounds = array<i64: 16, 512>}, {pipeline_mode = #tpu.pipeline_mode<synchronous>, transform_indices = @transform_3, window_bounds = array<i64: 16, 512>}, {pipeline_mode = #tpu.pipeline_mode<synchronous>, transform_indices = @transform_4, window_bounds = array<i64: 1, 512>}, {pipeline_mode = #tpu.pipeline_mode<synchronous>, transform_indices = @transform_5, window_bounds = array<i64: 512, 384>}, {pipeline_mode = #tpu.pipeline_mode<synchronous>, transform_indices = @transform_6, window_bounds = array<i64: 1, 384>}, {pipeline_mode = #tpu.pipeline_mode<synchronous>, transform_indices = @transform_7, window_bounds = array<i64: 384, 128>}, {pipeline_mode = #tpu.pipeline_mode<synchronous>, transform_indices = @transform_8, window_bounds = array<i64: 1, 128>}, {transform_indices = @transform_9, window_bounds = array<i64: 8, 128>}]} {
    %c0 = arith.constant 0 : index
    %c0_0 = arith.constant 0 : index
    %0 = vector.load %arg1[%c0, %c0_0] : memref<8x16xf32, #tpu.memory_space<vmem>>, vector<8x16xf32>
    %c0_1 = arith.constant 0 : index
    %c0_2 = arith.constant 0 : index
    %1 = vector.load %arg3[%c0_1, %c0_2] : memref<16x512xbf16, #tpu.memory_space<vmem>>, vector<16x512xbf16>
    %cst = arith.constant dense<0.000000e+00> : vector<8x512xf32>
    %2 = tpu.matmul %0, %1, %cst {dimension_numbers = #tpu.dot_dimension_numbers<[1], [0], [0], [1], [0, 0, 1, 1], [], []>} : vector<8x16xf32>, vector<16x512xbf16>, vector<8x512xf32> -> vector<8x512xf32>
    %c0_3 = arith.constant 0 : index
    %c0_4 = arith.constant 0 : index
    %3 = vector.load %arg2[%c0_3, %c0_4] : memref<8x16xf32, #tpu.memory_space<vmem>>, vector<8x16xf32>
    %c0_5 = arith.constant 0 : index
    %c0_6 = arith.constant 0 : index
    %4 = vector.load %arg4[%c0_5, %c0_6] : memref<16x512xbf16, #tpu.memory_space<vmem>>, vector<16x512xbf16>
    %cst_7 = arith.constant dense<0.000000e+00> : vector<8x512xf32>
    %5 = tpu.matmul %3, %4, %cst_7 {dimension_numbers = #tpu.dot_dimension_numbers<[1], [0], [0], [1], [0, 0, 1, 1], [], []>} : vector<8x16xf32>, vector<16x512xbf16>, vector<8x512xf32> -> vector<8x512xf32>
    %6 = arith.addf %2, %5 : vector<8x512xf32>
    %c0_8 = arith.constant 0 : index
    %c0_9 = arith.constant 0 : index
    %7 = vector.load %arg5[%c0_8, %c0_9] : memref<1x512xf32, #tpu.memory_space<vmem>>, vector<1x512xf32>
    %8 = vector.broadcast %7 : vector<1x512xf32> to vector<8x512xf32>
    %9 = arith.addf %6, %8 : vector<8x512xf32>
    %cst_10 = arith.constant 0.000000e+00 : f32
    %10 = vector.broadcast %cst_10 : f32 to vector<8x512xf32>
    %11 = arith.maximumf %9, %10 : vector<8x512xf32>
    %c0_11 = arith.constant 0 : index
    %c0_12 = arith.constant 0 : index
    %12 = vector.load %arg6[%c0_11, %c0_12] : memref<512x384xbf16, #tpu.memory_space<vmem>>, vector<512x384xbf16>
    %cst_13 = arith.constant dense<0.000000e+00> : vector<8x384xf32>
    %13 = tpu.matmul %11, %12, %cst_13 {dimension_numbers = #tpu.dot_dimension_numbers<[1], [0], [0], [1], [0, 0, 1, 1], [], []>} : vector<8x512xf32>, vector<512x384xbf16>, vector<8x384xf32> -> vector<8x384xf32>
    %c0_14 = arith.constant 0 : index
    %c0_15 = arith.constant 0 : index
    %14 = vector.load %arg7[%c0_14, %c0_15] : memref<1x384xf32, #tpu.memory_space<vmem>>, vector<1x384xf32>
    %15 = vector.broadcast %14 : vector<1x384xf32> to vector<8x384xf32>
    %16 = arith.addf %13, %15 : vector<8x384xf32>
    %cst_16 = arith.constant 0.000000e+00 : f32
    %17 = vector.broadcast %cst_16 : f32 to vector<8x384xf32>
    %18 = arith.maximumf %16, %17 : vector<8x384xf32>
    %c0_17 = arith.constant 0 : index
    %c0_18 = arith.constant 0 : index
    %19 = vector.load %arg8[%c0_17, %c0_18] : memref<384x128xbf16, #tpu.memory_space<vmem>>, vector<384x128xbf16>
    %cst_19 = arith.constant dense<0.000000e+00> : vector<8x128xf32>
    %20 = tpu.matmul %18, %19, %cst_19 {dimension_numbers = #tpu.dot_dimension_numbers<[1], [0], [0], [1], [0, 0, 1, 1], [], []>} : vector<8x384xf32>, vector<384x128xbf16>, vector<8x128xf32> -> vector<8x128xf32>
    %c0_20 = arith.constant 0 : index
    %c0_21 = arith.constant 0 : index
    %21 = vector.load %arg9[%c0_20, %c0_21] : memref<1x128xf32, #tpu.memory_space<vmem>>, vector<1x128xf32>
    %22 = vector.broadcast %21 : vector<1x128xf32> to vector<8x128xf32>
    %23 = arith.addf %20, %22 : vector<8x128xf32>
    %c0_22 = arith.constant 0 : index
    %c0_23 = arith.constant 0 : index
    %24 = vector.load %arg10[%c0_22, %c0_23] : memref<8x128xf32, #tpu.memory_space<vmem>>, vector<8x128xf32>
    tpu.vector_store %arg10[%c0_22, %c0_23], %23 {strides = array<i32>} : memref<8x128xf32, #tpu.memory_space<vmem>>, vector<8x128xf32>,
    return
  }
  func.func @transform_0(%arg0: i32) -> (i32, i32) {
    %c0_i32 = arith.constant 0 : i32
    %c0_i32_0 = arith.constant 0 : i32
    return %arg0, %c0_i32 : i32, i32
  }
  func.func @transform_1(%arg0: i32) -> (i32, i32) {
    %c0_i32 = arith.constant 0 : i32
    %c0_i32_0 = arith.constant 0 : i32
    return %arg0, %c0_i32 : i32, i32
  }
  func.func @transform_2(%arg0: i32) -> (i32, i32) {
    %c0_i32 = arith.constant 0 : i32
    %c0_i32_0 = arith.constant 0 : i32
    %c0_i32_1 = arith.constant 0 : i32
    return %c0_i32, %c0_i32_0 : i32, i32
  }
  func.func @transform_3(%arg0: i32) -> (i32, i32) {
    %c0_i32 = arith.constant 0 : i32
    %c0_i32_0 = arith.constant 0 : i32
    %c0_i32_1 = arith.constant 0 : i32
    return %c0_i32, %c0_i32_0 : i32, i32
  }
  func.func @transform_4(%arg0: i32) -> (i32, i32) {
    %c0_i32 = arith.constant 0 : i32
    %c0_i32_0 = arith.constant 0 : i32
    %c0_i32_1 = arith.constant 0 : i32
    return %c0_i32, %c0_i32_0 : i32, i32
  }
  func.func @transform_5(%arg0: i32) -> (i32, i32) {
    %c0_i32 = arith.constant 0 : i32
    %c0_i32_0 = arith.constant 0 : i32
    %c0_i32_1 = arith.constant 0 : i32
    return %c0_i32, %c0_i32_0 : i32, i32
  }
  func.func @transform_6(%arg0: i32) -> (i32, i32) {
    %c0_i32 = arith.constant 0 : i32
    %c0_i32_0 = arith.constant 0 : i32
    %c0_i32_1 = arith.constant 0 : i32
    return %c0_i32, %c0_i32_0 : i32, i32
  }
  func.func @transform_7(%arg0: i32) -> (i32, i32) {
    %c0_i32 = arith.constant 0 : i32
    %c0_i32_0 = arith.constant 0 : i32
    %c0_i32_1 = arith.constant 0 : i32
    return %c0_i32, %c0_i32_0 : i32, i32
  }
  func.func @transform_8(%arg0: i32) -> (i32, i32) {
    %c0_i32 = arith.constant 0 : i32
    %c0_i32_0 = arith.constant 0 : i32
    %c0_i32_1 = arith.constant 0 : i32
    return %c0_i32, %c0_i32_0 : i32, i32
  }
  func.func @transform_9(%arg0: i32) -> (i32, i32) {
    %c0_i32 = arith.constant 0 : i32
    %c0_i32_0 = arith.constant 0 : i32
    return %arg0, %c0_i32 : i32, i32
  }
}

</mosaic_0001>

<llo_original>
// kernel: tpu_custom_call.1
$region0: #{tpu_custom_call.1}
  #allocation0 [shape = 'u32[]', space=smem, size = 0x4, offset = 0x4, fixed_abs, tag = 'smem constant byte address 0x4 - core index']
  #allocation1 [shape = 'u32[72,128]{1,0:T(1,128)}', space=vmem, size = 0x9000, scoped, tag = 'internal scratch']
  %s0 = inlined_call_operand.hbm [shape: f32[8,16], index: 0, kind: input, shape index: {}]
  %s1 = inlined_call_operand.hbm [shape: f32[8,16], index: 1, kind: input, shape index: {}]
  %s2 = inlined_call_operand.hbm [shape: bf16[16,512], index: 2, kind: input, shape index: {}]
  %s3 = inlined_call_operand.hbm [shape: bf16[16,512], index: 3, kind: input, shape index: {}]
  %s4 = inlined_call_operand.hbm [shape: f32[1,512], index: 4, kind: input, shape index: {}]
  %s5 = inlined_call_operand.hbm [shape: bf16[512,384], index: 5, kind: input, shape index: {}]
  %s6 = inlined_call_operand.vmem [shape: f32[1,384], index: 6, kind: input, shape index: {}]
  %s7 = inlined_call_operand.hbm [shape: bf16[384,128], index: 7, kind: input, shape index: {}]
  %s8 = inlined_call_operand.vmem [shape: f32[1,128], index: 8, kind: input, shape index: {}]
  %s9 = inlined_call_operand.hbm [shape: f32[8,128], index: 9, kind: output, shape index: {}]
  %s10 = sld [smem:[#allocation0]]
  $region74: #{tpu_custom_call.1} parent=0
    _
  %s12 = ssub.s32 1, %s10
  %s13 = scalar_select 0, %s12, %s10
  $region1: #{tpu_custom_call.1} parent=0
    #allocation2 [shape = 'u8[4096]{0}', space=vmem, size = 0x1000, scoped, tag = 'input window, operand 0, single buffered']
    #allocation3 [shape = 's32[1]{0}', space=sflag, size = 0x4, scoped, tag = 'scoped memory for tpu_custom_call.1']
    #allocation4 [shape = 's32[1]{0}', space=sflag, size = 0x4, scoped, tag = 'scoped memory for tpu_custom_call.1']
    #allocation5 [shape = 'u8[4096]{0}', space=vmem, size = 0x1000, scoped, tag = 'input window, operand 1, single buffered']
    #allocation6 [shape = 's32[1]{0}', space=sflag, size = 0x4, scoped, tag = 'scoped memory for tpu_custom_call.1']
    #allocation7 [shape = 'u8[16384]{0}', space=vmem, size = 0x4000, scoped, tag = 'input window, operand 2, single buffered']
    #allocation8 [shape = 'u8[16384]{0}', space=vmem, size = 0x4000, scoped, tag = 'input window, operand 3, single buffered']
    #allocation9 [shape = 's32[1]{0}', space=sflag, size = 0x4, scoped, tag = 'scoped memory for tpu_custom_call.1']
    #allocation10 [shape = 'u8[2048]{0}', space=vmem, size = 0x800, scoped, tag = 'input window, operand 4, single buffered']
    #allocation11 [shape = 'u8[393216]{0}', space=vmem, size = 0x60000, scoped, tag = 'input window, operand 5, single buffered']
    #allocation12 [shape = 's32[1]{0}', space=sflag, size = 0x4, scoped, tag = 'scoped memory for tpu_custom_call.1']
    #allocation13 [shape = 'u8[98304]{0}', space=vmem, size = 0x18000, scoped, tag = 'input window, operand 7, single buffered']
    #allocation14 [shape = 'u8[4096]{0}', space=vmem, size = 0x1000, scoped, tag = 'output window, operand 0, single buffered']
    %14 = vsyncpa [#allocation3], 0
    %15 = vsyncpa [#allocation6], 0
    %16 = vsyncpa [#allocation9], 0
    %17 = vsyncpa [#allocation12], 0
    %18 = vsyncpa [#allocation4], 0
    // Predicated region
    $region2: #{tpu_custom_call.1} parent=1 // pred_check
      _
    $region3: #{tpu_custom_call.1} parent=1 // pred_check_branch
      %20 = sbr.rel (0) target = $region5
    $region4: #{tpu_custom_call.1} parent=1 // pred_region
      %22 = vsyncadd [#allocation3], 0
      %s24 = sshll.u32 %s0, 4
      %s25 = int_to_ptr.hbm [resolvable:$true] %s24
      %s26 = sshll.u32 [#allocation2], 4
      %s27 = int_to_ptr.vmem [resolvable:$true] %s26
      %29 = dma.hbm_to_vmem [thread:$0]  %s25, 128, %s27, [#allocation3]
    $region5: #{tpu_custom_call.1} parent=1 // pred_fallthru
      _
    // Predicated region
    $region6: #{tpu_custom_call.1} parent=1 // pred_check
      _
    $region7: #{tpu_custom_call.1} parent=1 // pred_check_branch
      %31 = sbr.rel (0) target = $region9
    $region8: #{tpu_custom_call.1} parent=1 // pred_region
      %33 = vsyncadd [#allocation6], 0
      %s35 = sshll.u32 %s1, 4
      %s36 = int_to_ptr.hbm [resolvable:$true] %s35
      %s37 = sshll.u32 [#allocation5], 4
      %s38 = int_to_ptr.vmem [resolvable:$true] %s37
      %40 = dma.hbm_to_vmem [thread:$0]  %s36, 128, %s38, [#allocation6]
    $region9: #{tpu_custom_call.1} parent=1 // pred_fallthru
      _
    // Predicated region
    $region10: #{tpu_custom_call.1} parent=1 // pred_check
      _
    $region11: #{tpu_custom_call.1} parent=1 // pred_check_branch
      %42 = sbr.rel (0) target = $region13
    $region12: #{tpu_custom_call.1} parent=1 // pred_region
      %44 = vsyncadd [#allocation6], 0
      %s45 = sshll.u32 %s2, 4
      %s46 = int_to_ptr.hbm [resolvable:$true] %s45
      %s47 = sshll.u32 [#allocation7], 4
      %s48 = int_to_ptr.vmem [resolvable:$true] %s47
      %53 = dma.hbm_to_vmem [thread:$0]  %s46, 512, %s48, [#allocation6], 256, 256, 16
    $region13: #{tpu_custom_call.1} parent=1 // pred_fallthru
      _
    // Predicated region
    $region14: #{tpu_custom_call.1} parent=1 // pred_check
      _
    $region15: #{tpu_custom_call.1} parent=1 // pred_check_branch
      %55 = sbr.rel (0) target = $region17
    $region16: #{tpu_custom_call.1} parent=1 // pred_region
      %57 = vsyncadd [#allocation9], 0
      %s58 = sshll.u32 %s3, 4
      %s59 = int_to_ptr.hbm [resolvable:$true] %s58
      %s60 = sshll.u32 [#allocation8], 4
      %s61 = int_to_ptr.vmem [resolvable:$true] %s60
      %66 = dma.hbm_to_vmem [thread:$0]  %s59, 512, %s61, [#allocation9], 256, 256, 16
    $region17: #{tpu_custom_call.1} parent=1 // pred_fallthru
      _
    // Predicated region
    $region18: #{tpu_custom_call.1} parent=1 // pred_check
      _
    $region19: #{tpu_custom_call.1} parent=1 // pred_check_branch
      %68 = sbr.rel (0) target = $region21
    $region20: #{tpu_custom_call.1} parent=1 // pred_region
      %70 = vsyncadd [#allocation9], 0
      %s72 = sshll.u32 %s4, 4
      %s73 = int_to_ptr.hbm [resolvable:$true] %s72
      %s74 = sshll.u32 [#allocation10], 4
      %s75 = int_to_ptr.vmem [resolvable:$true] %s74
      %77 = dma.hbm_to_vmem [thread:$0]  %s73, 64, %s75, [#allocation9]
    $region21: #{tpu_custom_call.1} parent=1 // pred_fallthru
      _
    // Predicated region
    $region22: #{tpu_custom_call.1} parent=1 // pred_check
      _
    $region23: #{tpu_custom_call.1} parent=1 // pred_check_branch
      %79 = sbr.rel (0) target = $region25
    $region24: #{tpu_custom_call.1} parent=1 // pred_region
      %81 = vsyncadd [#allocation12], 0
      %s82 = sshll.u32 %s5, 4
      %s83 = int_to_ptr.hbm [resolvable:$true] %s82
      %s84 = sshll.u32 [#allocation11], 4
      %s85 = int_to_ptr.vmem [resolvable:$true] %s84
      %90 = dma.hbm_to_vmem [thread:$0]  %s83, 12288, %s85, [#allocation12], 192, 192, 12
    $region25: #{tpu_custom_call.1} parent=1 // pred_fallthru
      _
    // Predicated region
    $region26: #{tpu_custom_call.1} parent=1 // pred_check
      _
    $region27: #{tpu_custom_call.1} parent=1 // pred_check_branch
      %92 = sbr.rel (0) target = $region29
    $region28: #{tpu_custom_call.1} parent=1 // pred_region
      _
    $region29: #{tpu_custom_call.1} parent=1 // pred_fallthru
      _
    // Predicated region
    $region30: #{tpu_custom_call.1} parent=1 // pred_check
      _
    $region31: #{tpu_custom_call.1} parent=1 // pred_check_branch
      %94 = sbr.rel (0) target = $region33
    $region32: #{tpu_custom_call.1} parent=1 // pred_region
      %96 = vsyncadd [#allocation12], 0
      %s97 = sshll.u32 %s7, 4
      %s98 = int_to_ptr.hbm [resolvable:$true] %s97
      %s99 = sshll.u32 [#allocation13], 4
      %s100 = int_to_ptr.vmem [resolvable:$true] %s99
      %105 = dma.hbm_to_vmem [thread:$0]  %s98, 3072, %s100, [#allocation12], 64, 64, 4
    $region33: #{tpu_custom_call.1} parent=1 // pred_fallthru
      _
    // Predicated region
    $region34: #{tpu_custom_call.1} parent=1 // pred_check
      _
    $region35: #{tpu_custom_call.1} parent=1 // pred_check_branch
      %107 = sbr.rel (0) target = $region37
    $region36: #{tpu_custom_call.1} parent=1 // pred_region
      _
    $region37: #{tpu_custom_call.1} parent=1 // pred_fallthru
      _
    // Predicated region
    $region38: #{tpu_custom_call.1} parent=1 // pred_check
      _
    $region39: #{tpu_custom_call.1} parent=1 // pred_check_branch
      %109 = sbr.rel (0) target = $region41
    $region40: #{tpu_custom_call.1} parent=1 // pred_region
      %111 = dma.done [#allocation3], 128
    $region41: #{tpu_custom_call.1} parent=1 // pred_fallthru
      _
    // Predicated region
    $region42: #{tpu_custom_call.1} parent=1 // pred_check
      _
    $region43: #{tpu_custom_call.1} parent=1 // pred_check_branch
      %113 = sbr.rel (0) target = $region45
    $region44: #{tpu_custom_call.1} parent=1 // pred_region
      %115 = dma.done [#allocation6], 128
    $region45: #{tpu_custom_call.1} parent=1 // pred_fallthru
      _
    // Predicated region
    $region46: #{tpu_custom_call.1} parent=1 // pred_check
      _
    $region47: #{tpu_custom_call.1} parent=1 // pred_check_branch
      %117 = sbr.rel (0) target = $region49
    $region48: #{tpu_custom_call.1} parent=1 // pred_region
      %119 = dma.done [#allocation6], 512
    $region49: #{tpu_custom_call.1} parent=1 // pred_fallthru
      _
    // Predicated region
    $region50: #{tpu_custom_call.1} parent=1 // pred_check
      _
    $region51: #{tpu_custom_call.1} parent=1 // pred_check_branch
      %121 = sbr.rel (0) target = $region53
    $region52: #{tpu_custom_call.1} parent=1 // pred_region
      %123 = dma.done [#allocation9], 512
    $region53: #{tpu_custom_call.1} parent=1 // pred_fallthru
      _
    // Predicated region
    $region54: #{tpu_custom_call.1} parent=1 // pred_check
      _
    $region55: #{tpu_custom_call.1} parent=1 // pred_check_branch
      %125 = sbr.rel (0) target = $region57
    $region56: #{tpu_custom_call.1} parent=1 // pred_region
      %127 = dma.done [#allocation9], 64
    $region57: #{tpu_custom_call.1} parent=1 // pred_fallthru
      _
    // Predicated region
    $region58: #{tpu_custom_call.1} parent=1 // pred_check
      _
    $region59: #{tpu_custom_call.1} parent=1 // pred_check_branch
      %129 = sbr.rel (0) target = $region61
    $region60: #{tpu_custom_call.1} parent=1 // pred_region
      %131 = dma.done [#allocation12], 12288
    $region61: #{tpu_custom_call.1} parent=1 // pred_fallthru
      _
    // Predicated region
    $region62: #{tpu_custom_call.1} parent=1 // pred_check
      _
    $region63: #{tpu_custom_call.1} parent=1 // pred_check_branch
      %133 = sbr.rel (0) target = $region65
    $region64: #{tpu_custom_call.1} parent=1 // pred_region
      %135 = dma.done [#allocation12], 3072
    $region65: #{tpu_custom_call.1} parent=1 // pred_fallthru
      _
    %v137 = vld [vmem:[#allocation2] sm:$0xff]
    %v138 = vld [vmem:[#allocation7] sm:$0xff]
    %v139 = vld [vmem:[#allocation7 + $0x8] sm:$0xff]
    %v140 = vld [vmem:[#allocation7 + $0x10] sm:$0xff]
    %v141 = vld [vmem:[#allocation7 + $0x18] sm:$0xff]
    %v142 = vld [vmem:[#allocation5] sm:$0xff]
    %v143 = vld [vmem:[#allocation8] sm:$0xff]
    %v144 = vld [vmem:[#allocation8 + $0x8] sm:$0xff]
    %v145 = vld [vmem:[#allocation8 + $0x10] sm:$0xff]
    %v146 = vld [vmem:[#allocation8 + $0x18] sm:$0xff]
    %v151 = vunpack.c.l.b16 %v143
    %v152 = vunpack.c.h.b16 %v143
    %v153 = vunpack.c.l.b16 %v144
    %v154 = vunpack.c.h.b16 %v144
    %v155 = vunpack.c.l.b16 %v145
    %v156 = vunpack.c.h.b16 %v145
    %v157 = vunpack.c.l.b16 %v146
    %v158 = vunpack.c.h.b16 %v146
    %v159 = vpack.c.b16 %v155, %v151
    %v160 = vpack.c.b16 %v156, %v152
    %v161 = vpack.c.b16 %v157, %v153
    %v162 = vpack.c.b16 %v158, %v154
    %vm167 = vcmask 130048
    %v169 = vsel %vm167, %v142, 0
    %171 = vmatpush.bf16.msra.mxu0 0
    %172 = vmatpush.bf16.msra.mxu0 0
    %173 = vmatpush.bf16.msra.mxu0 0
    %174 = vmatpush.bf16.msra.mxu0 0
    %175 = vmatpush.bf16.msra.mxu0 0
    %176 = vmatpush.bf16.msra.mxu0 0
    %177 = vmatpush.bf16.msra.mxu0 0
    %178 = vmatpush.bf16.msra.mxu0 %v159
    %179 = vmatmul.f32.gmra.mxu0 %v169
    %v180 = vpop.f32.mrf.mxu0
    %v181 = vadd.f32 0.0, %v180
    %182 = vdwg.mxu0
    %183 = vmatpush.bf16.msra.mxu0 0
    %184 = vmatpush.bf16.msra.mxu0 0
    %185 = vmatpush.bf16.msra.mxu0 0
    %186 = vmatpush.bf16.msra.mxu0 0
    %187 = vmatpush.bf16.msra.mxu0 0
    %188 = vmatpush.bf16.msra.mxu0 0
    %189 = vmatpush.bf16.msra.mxu0 0
    %190 = vmatpush.bf16.msra.mxu0 %v160
    %191 = vmatmul.f32.gmra.mxu0 %v169
    %v192 = vpop.f32.mrf.mxu0
    %v193 = vadd.f32 0.0, %v192
    %194 = vdwg.mxu0
    %195 = vmatpush.bf16.msra.mxu0 0
    %196 = vmatpush.bf16.msra.mxu0 0
    %197 = vmatpush.bf16.msra.mxu0 0
    %198 = vmatpush.bf16.msra.mxu0 0
    %199 = vmatpush.bf16.msra.mxu0 0
    %200 = vmatpush.bf16.msra.mxu0 0
    %201 = vmatpush.bf16.msra.mxu0 0
    %202 = vmatpush.bf16.msra.mxu0 %v161
    %203 = vmatmul.f32.gmra.mxu0 %v169
    %v204 = vpop.f32.mrf.mxu0
    %v205 = vadd.f32 0.0, %v204
    %206 = vdwg.mxu0
    %207 = vmatpush.bf16.msra.mxu0 0
    %208 = vmatpush.bf16.msra.mxu0 0
    %209 = vmatpush.bf16.msra.mxu0 0
    %210 = vmatpush.bf16.msra.mxu0 0
    %211 = vmatpush.bf16.msra.mxu0 0
    %212 = vmatpush.bf16.msra.mxu0 0
    %213 = vmatpush.bf16.msra.mxu0 0
    %214 = vmatpush.bf16.msra.mxu0 %v162
    %215 = vmatmul.f32.gmra.mxu0 %v169
    %v216 = vpop.f32.mrf.mxu0
    %v217 = vadd.f32 0.0, %v216
    %218 = vdwg.mxu0
    %v223 = vunpack.c.l.b16 %v138
    %v224 = vunpack.c.h.b16 %v138
    %v225 = vunpack.c.l.b16 %v139
    %v226 = vunpack.c.h.b16 %v139
    %v227 = vunpack.c.l.b16 %v140
    %v228 = vunpack.c.h.b16 %v140
    %v229 = vunpack.c.l.b16 %v141
    %v230 = vunpack.c.h.b16 %v141
    %v231 = vpack.c.b16 %v227, %v223
    %v232 = vpack.c.b16 %v228, %v224
    %v233 = vpack.c.b16 %v229, %v225
    %v234 = vpack.c.b16 %v230, %v226
    %v240 = vsel %vm167, %v137, 0
    %242 = vmatpush.bf16.msra.mxu0 0
    %243 = vmatpush.bf16.msra.mxu0 0
    %244 = vmatpush.bf16.msra.mxu0 0
    %245 = vmatpush.bf16.msra.mxu0 0
    %246 = vmatpush.bf16.msra.mxu0 0
    %247 = vmatpush.bf16.msra.mxu0 0
    %248 = vmatpush.bf16.msra.mxu0 0
    %249 = vmatpush.bf16.msra.mxu0 %v231
    %250 = vmatmul.f32.gmra.mxu0 %v240
    %v251 = vpop.f32.mrf.mxu0
    %v252 = vadd.f32 %v181, %v251
    %253 = vdwg.mxu0
    %254 = vmatpush.bf16.msra.mxu0 0
    %255 = vmatpush.bf16.msra.mxu0 0
    %256 = vmatpush.bf16.msra.mxu0 0
    %257 = vmatpush.bf16.msra.mxu0 0
    %258 = vmatpush.bf16.msra.mxu0 0
    %259 = vmatpush.bf16.msra.mxu0 0
    %260 = vmatpush.bf16.msra.mxu0 0
    %261 = vmatpush.bf16.msra.mxu0 %v232
    %262 = vmatmul.f32.gmra.mxu0 %v240
    %v263 = vpop.f32.mrf.mxu0
    %v264 = vadd.f32 %v193, %v263
    %265 = vdwg.mxu0
    %266 = vmatpush.bf16.msra.mxu0 0
    %267 = vmatpush.bf16.msra.mxu0 0
    %268 = vmatpush.bf16.msra.mxu0 0
    %269 = vmatpush.bf16.msra.mxu0 0
    %270 = vmatpush.bf16.msra.mxu0 0
    %271 = vmatpush.bf16.msra.mxu0 0
    %272 = vmatpush.bf16.msra.mxu0 0
    %273 = vmatpush.bf16.msra.mxu0 %v233
    %274 = vmatmul.f32.gmra.mxu0 %v240
    %v275 = vpop.f32.mrf.mxu0
    %v276 = vadd.f32 %v205, %v275
    %277 = vdwg.mxu0
    %278 = vmatpush.bf16.msra.mxu0 0
    %279 = vmatpush.bf16.msra.mxu0 0
    %280 = vmatpush.bf16.msra.mxu0 0
    %281 = vmatpush.bf16.msra.mxu0 0
    %282 = vmatpush.bf16.msra.mxu0 0
    %283 = vmatpush.bf16.msra.mxu0 0
    %284 = vmatpush.bf16.msra.mxu0 0
    %285 = vmatpush.bf16.msra.mxu0 %v234
    %286 = vmatmul.f32.gmra.mxu0 %v240
    %v287 = vpop.f32.mrf.mxu0
    %v288 = vadd.f32 %v217, %v287
    %289 = vdwg.mxu0
    %v290 = vld [vmem:[#allocation10] sm:$0xf]
    %v292 = vperm.slane %v290, 0
    %v293 = vperm.slane %v290, 1
    %v294 = vperm.slane %v290, 2
    %v295 = vperm.slane %v290, 3
    %v300 = vadd.f32 %v252, %v292
    %v301 = vadd.f32 %v264, %v293
    %v302 = vadd.f32 %v276, %v294
    %v303 = vadd.f32 %v288, %v295
    %v304 = vmax.f32 %v300, 0.0
    %v305 = vmax.f32 %v301, 0.0
    %v306 = vmax.f32 %v302, 0.0
    %v307 = vmax.f32 %v303, 0.0
    %v308 = vld [vmem:[#allocation11] sm:$0xff]
    %v309 = vld [vmem:[#allocation11 + $0x8] sm:$0xf]
    %v310 = vld [vmem:[#allocation11 + $0xc] sm:$0xff]
    %v311 = vld [vmem:[#allocation11 + $0x14] sm:$0xf]
    %v312 = vld [vmem:[#allocation11 + $0x18] sm:$0xff]
    %v313 = vld [vmem:[#allocation11 + $0x20] sm:$0xf]
    %v314 = vld [vmem:[#allocation11 + $0x24] sm:$0xff]
    %v315 = vld [vmem:[#allocation11 + $0x2c] sm:$0xf]
    %v316 = vld [vmem:[#allocation11 + $0x30] sm:$0xff]
    %v317 = vld [vmem:[#allocation11 + $0x38] sm:$0xf]
    %v318 = vld [vmem:[#allocation11 + $0x3c] sm:$0xff]
    %v319 = vld [vmem:[#allocation11 + $0x44] sm:$0xf]
    %v320 = vld [vmem:[#allocation11 + $0x48] sm:$0xff]
    %v321 = vld [vmem:[#allocation11 + $0x50] sm:$0xf]
    %v322 = vld [vmem:[#allocation11 + $0x54] sm:$0xff]
    %v323 = vld [vmem:[#allocation11 + $0x5c] sm:$0xf]
    %v324 = vld [vmem:[#allocation11 + $0x60] sm:$0xff]
    %v325 = vld [vmem:[#allocation11 + $0x68] sm:$0xf]
    %v326 = vld [vmem:[#allocation11 + $0x6c] sm:$0xff]
    %v327 = vld [vmem:[#allocation11 + $0x74] sm:$0xf]
    %v328 = vld [vmem:[#allocation11 + $0x78] sm:$0xff]
    %v329 = vld [vmem:[#allocation11 + $0x80] sm:$0xf]
    %v330 = vld [vmem:[#allocation11 + $0x84] sm:$0xff]
    %v331 = vld [vmem:[#allocation11 + $0x8c] sm:$0xf]
    %v332 = vld [vmem:[#allocation11 + $0x90] sm:$0xff]
    %v333 = vld [vmem:[#allocation11 + $0x98] sm:$0xf]
    %v334 = vld [vmem:[#allocation11 + $0x9c] sm:$0xff]
    %v335 = vld [vmem:[#allocation11 + $0xa4] sm:$0xf]
    %v336 = vld [vmem:[#allocation11 + $0xa8] sm:$0xff]
    %v337 = vld [vmem:[#allocation11 + $0xb0] sm:$0xf]
    %v338 = vld [vmem:[#allocation11 + $0xb4] sm:$0xff]
    %v339 = vld [vmem:[#allocation11 + $0xbc] sm:$0xf]
    %v340 = vld [vmem:[#allocation11 + $0xc0] sm:$0xff]
    %v341 = vld [vmem:[#allocation11 + $0xc8] sm:$0xf]
    %v342 = vld [vmem:[#allocation11 + $0xcc] sm:$0xff]
    %v343 = vld [vmem:[#allocation11 + $0xd4] sm:$0xf]
    %v344 = vld [vmem:[#allocation11 + $0xd8] sm:$0xff]
    %v345 = vld [vmem:[#allocation11 + $0xe0] sm:$0xf]
    %v346 = vld [vmem:[#allocation11 + $0xe4] sm:$0xff]
    %v347 = vld [vmem:[#allocation11 + $0xec] sm:$0xf]
    %v348 = vld [vmem:[#allocation11 + $0xf0] sm:$0xff]
    %v349 = vld [vmem:[#allocation11 + $0xf8] sm:$0xf]
    %v350 = vld [vmem:[#allocation11 + $0xfc] sm:$0xff]
    %v351 = vld [vmem:[#allocation11 + $0x104] sm:$0xf]
    %v352 = vld [vmem:[#allocation11 + $0x108] sm:$0xff]
    %v353 = vld [vmem:[#allocation11 + $0x110] sm:$0xf]
    %v354 = vld [vmem:[#allocation11 + $0x114] sm:$0xff]
    %v355 = vld [vmem:[#allocation11 + $0x11c] sm:$0xf]
    %v356 = vld [vmem:[#allocation11 + $0x120] sm:$0xff]
    %v357 = vld [vmem:[#allocation11 + $0x128] sm:$0xf]
    %v358 = vld [vmem:[#allocation11 + $0x12c] sm:$0xff]
    %v359 = vld [vmem:[#allocation11 + $0x134] sm:$0xf]
    %v360 = vld [vmem:[#allocation11 + $0x138] sm:$0xff]
    %v361 = vld [vmem:[#allocation11 + $0x140] sm:$0xf]
    %v362 = vld [vmem:[#allocation11 + $0x144] sm:$0xff]
    %v363 = vld [vmem:[#allocation11 + $0x14c] sm:$0xf]
    %v364 = vld [vmem:[#allocation11 + $0x150] sm:$0xff]
    %v365 = vld [vmem:[#allocation11 + $0x158] sm:$0xf]
    %v366 = vld [vmem:[#allocation11 + $0x15c] sm:$0xff]
    %v367 = vld [vmem:[#allocation11 + $0x164] sm:$0xf]
    %v368 = vld [vmem:[#allocation11 + $0x168] sm:$0xff]
    %v369 = vld [vmem:[#allocation11 + $0x170] sm:$0xf]
    %v370 = vld [vmem:[#allocation11 + $0x174] sm:$0xff]
    %v371 = vld [vmem:[#allocation11 + $0x17c] sm:$0xf]
    %v372 = vld [vmem:[#allocation11 + $0x180] sm:$0xff]
    %v373 = vld [vmem:[#allocation11 + $0x188] sm:$0xf]
    %v374 = vld [vmem:[#allocation11 + $0x18c] sm:$0xff]
    %v375 = vld [vmem:[#allocation11 + $0x194] sm:$0xf]
    %v376 = vld [vmem:[#allocation11 + $0x198] sm:$0xff]
    %v377 = vld [vmem:[#allocation11 + $0x1a0] sm:$0xf]
    %v378 = vld [vmem:[#allocation11 + $0x1a4] sm:$0xff]
    %v379 = vld [vmem:[#allocation11 + $0x1ac] sm:$0xf]
    %v380 = vld [vmem:[#allocation11 + $0x1b0] sm:$0xff]
    %v381 = vld [vmem:[#allocation11 + $0x1b8] sm:$0xf]
    %v382 = vld [vmem:[#allocation11 + $0x1bc] sm:$0xff]
    %v383 = vld [vmem:[#allocation11 + $0x1c4] sm:$0xf]
    %v384 = vld [vmem:[#allocation11 + $0x1c8] sm:$0xff]
    %v385 = vld [vmem:[#allocation11 + $0x1d0] sm:$0xf]
    %v386 = vld [vmem:[#allocation11 + $0x1d4] sm:$0xff]
    %v387 = vld [vmem:[#allocation11 + $0x1dc] sm:$0xf]
    %v388 = vld [vmem:[#allocation11 + $0x1e0] sm:$0xff]
    %v389 = vld [vmem:[#allocation11 + $0x1e8] sm:$0xf]
    %v390 = vld [vmem:[#allocation11 + $0x1ec] sm:$0xff]
    %v391 = vld [vmem:[#allocation11 + $0x1f4] sm:$0xf]
    %v392 = vld [vmem:[#allocation11 + $0x1f8] sm:$0xff]
    %v393 = vld [vmem:[#allocation11 + $0x200] sm:$0xf]
    %v394 = vld [vmem:[#allocation11 + $0x204] sm:$0xff]
    %v395 = vld [vmem:[#allocation11 + $0x20c] sm:$0xf]
    %v396 = vld [vmem:[#allocation11 + $0x210] sm:$0xff]
    %v397 = vld [vmem:[#allocation11 + $0x218] sm:$0xf]
    %v398 = vld [vmem:[#allocation11 + $0x21c] sm:$0xff]
    %v399 = vld [vmem:[#allocation11 + $0x224] sm:$0xf]
    %v400 = vld [vmem:[#allocation11 + $0x228] sm:$0xff]
    %v401 = vld [vmem:[#allocation11 + $0x230] sm:$0xf]
    %v402 = vld [vmem:[#allocation11 + $0x234] sm:$0xff]
    %v403 = vld [vmem:[#allocation11 + $0x23c] sm:$0xf]
    %v404 = vld [vmem:[#allocation11 + $0x240] sm:$0xff]
    %v405 = vld [vmem:[#allocation11 + $0x248] sm:$0xf]
    %v406 = vld [vmem:[#allocation11 + $0x24c] sm:$0xff]
    %v407 = vld [vmem:[#allocation11 + $0x254] sm:$0xf]
    %v408 = vld [vmem:[#allocation11 + $0x258] sm:$0xff]
    %v409 = vld [vmem:[#allocation11 + $0x260] sm:$0xf]
    %v410 = vld [vmem:[#allocation11 + $0x264] sm:$0xff]
    %v411 = vld [vmem:[#allocation11 + $0x26c] sm:$0xf]
    %v412 = vld [vmem:[#allocation11 + $0x270] sm:$0xff]
    %v413 = vld [vmem:[#allocation11 + $0x278] sm:$0xf]
    %v414 = vld [vmem:[#allocation11 + $0x27c] sm:$0xff]
    %v415 = vld [vmem:[#allocation11 + $0x284] sm:$0xf]
    %v416 = vld [vmem:[#allocation11 + $0x288] sm:$0xff]
    %v417 = vld [vmem:[#allocation11 + $0x290] sm:$0xf]
    %v418 = vld [vmem:[#allocation11 + $0x294] sm:$0xff]
    %v419 = vld [vmem:[#allocation11 + $0x29c] sm:$0xf]
    %v420 = vld [vmem:[#allocation11 + $0x2a0] sm:$0xff]
    %v421 = vld [vmem:[#allocation11 + $0x2a8] sm:$0xf]
    %v422 = vld [vmem:[#allocation11 + $0x2ac] sm:$0xff]
    %v423 = vld [vmem:[#allocation11 + $0x2b4] sm:$0xf]
    %v424 = vld [vmem:[#allocation11 + $0x2b8] sm:$0xff]
    %v425 = vld [vmem:[#allocation11 + $0x2c0] sm:$0xf]
    %v426 = vld [vmem:[#allocation11 + $0x2c4] sm:$0xff]
    %v427 = vld [vmem:[#allocation11 + $0x2cc] sm:$0xf]
    %v428 = vld [vmem:[#allocation11 + $0x2d0] sm:$0xff]
    %v429 = vld [vmem:[#allocation11 + $0x2d8] sm:$0xf]
    %v430 = vld [vmem:[#allocation11 + $0x2dc] sm:$0xff]
    %v431 = vld [vmem:[#allocation11 + $0x2e4] sm:$0xf]
    %v432 = vld [vmem:[#allocation11 + $0x2e8] sm:$0xff]
    %v433 = vld [vmem:[#allocation11 + $0x2f0] sm:$0xf]
    %v434 = vld [vmem:[#allocation11 + $0x2f4] sm:$0xff]
    %v435 = vld [vmem:[#allocation11 + $0x2fc] sm:$0xf]
    %v436 = vld [vmem:[%s6] sm:$0x7]
    %v438 = vperm.slane %v436, 0
    %v439 = vperm.slane %v436, 1
    %v440 = vperm.slane %v436, 2
    %v572 = vunpack.c.l.b16 %v308
    %v573 = vunpack.c.h.b16 %v308
    %v574 = vunpack.c.l.b16 %v309
    %v575 = vunpack.c.l.b16 %v310
    %v576 = vunpack.c.h.b16 %v310
    %v577 = vunpack.c.l.b16 %v311
    %v578 = vunpack.c.l.b16 %v312
    %v579 = vunpack.c.h.b16 %v312
    %v580 = vunpack.c.l.b16 %v313
    %v581 = vunpack.c.l.b16 %v314
    %v582 = vunpack.c.h.b16 %v314
    %v583 = vunpack.c.l.b16 %v315
    %v584 = vunpack.c.l.b16 %v316
    %v585 = vunpack.c.h.b16 %v316
    %v586 = vunpack.c.l.b16 %v317
    %v587 = vunpack.c.l.b16 %v318
    %v588 = vunpack.c.h.b16 %v318
    %v589 = vunpack.c.l.b16 %v319
    %v590 = vunpack.c.l.b16 %v320
    %v591 = vunpack.c.h.b16 %v320
    %v592 = vunpack.c.l.b16 %v321
    %v593 = vunpack.c.l.b16 %v322
    %v594 = vunpack.c.h.b16 %v322
    %v595 = vunpack.c.l.b16 %v323
    %v596 = vunpack.c.l.b16 %v324
    %v597 = vunpack.c.h.b16 %v324
    %v598 = vunpack.c.l.b16 %v325
    %v599 = vunpack.c.l.b16 %v326
    %v600 = vunpack.c.h.b16 %v326
    %v601 = vunpack.c.l.b16 %v327
    %v602 = vunpack.c.l.b16 %v328
    %v603 = vunpack.c.h.b16 %v328
    %v604 = vunpack.c.l.b16 %v329
    %v605 = vunpack.c.l.b16 %v330
    %v606 = vunpack.c.h.b16 %v330
    %v607 = vunpack.c.l.b16 %v331
    %v608 = vunpack.c.l.b16 %v332
    %v609 = vunpack.c.h.b16 %v332
    %v610 = vunpack.c.l.b16 %v333
    %v611 = vunpack.c.l.b16 %v334
    %v612 = vunpack.c.h.b16 %v334
    %v613 = vunpack.c.l.b16 %v335
    %v614 = vunpack.c.l.b16 %v336
    %v615 = vunpack.c.h.b16 %v336
    %v616 = vunpack.c.l.b16 %v337
    %v617 = vunpack.c.l.b16 %v338
    %v618 = vunpack.c.h.b16 %v338
    %v619 = vunpack.c.l.b16 %v339
    %v620 = vunpack.c.l.b16 %v340
    %v621 = vunpack.c.h.b16 %v340
    %v622 = vunpack.c.l.b16 %v341
    %v623 = vunpack.c.l.b16 %v342
    %v624 = vunpack.c.h.b16 %v342
    %v625 = vunpack.c.l.b16 %v343
    %v626 = vunpack.c.l.b16 %v344
    %v627 = vunpack.c.h.b16 %v344
    %v628 = vunpack.c.l.b16 %v345
    %v629 = vunpack.c.l.b16 %v346
    %v630 = vunpack.c.h.b16 %v346
    %v631 = vunpack.c.l.b16 %v347
    %v632 = vunpack.c.l.b16 %v348
    %v633 = vunpack.c.h.b16 %v348
    %v634 = vunpack.c.l.b16 %v349
    %v635 = vunpack.c.l.b16 %v350
    %v636 = vunpack.c.h.b16 %v350
    %v637 = vunpack.c.l.b16 %v351
    %v638 = vunpack.c.l.b16 %v352
    %v639 = vunpack.c.h.b16 %v352
    %v640 = vunpack.c.l.b16 %v353
    %v641 = vunpack.c.l.b16 %v354
    %v642 = vunpack.c.h.b16 %v354
    %v643 = vunpack.c.l.b16 %v355
    %v644 = vunpack.c.l.b16 %v356
    %v645 = vunpack.c.h.b16 %v356
    %v646 = vunpack.c.l.b16 %v357
    %v647 = vunpack.c.l.b16 %v358
    %v648 = vunpack.c.h.b16 %v358
    %v649 = vunpack.c.l.b16 %v359
    %v650 = vunpack.c.l.b16 %v360
    %v651 = vunpack.c.h.b16 %v360
    %v652 = vunpack.c.l.b16 %v361
    %v653 = vunpack.c.l.b16 %v362
    %v654 = vunpack.c.h.b16 %v362
    %v655 = vunpack.c.l.b16 %v363
    %v656 = vunpack.c.l.b16 %v364
    %v657 = vunpack.c.h.b16 %v364
    %v658 = vunpack.c.l.b16 %v365
    %v659 = vunpack.c.l.b16 %v366
    %v660 = vunpack.c.h.b16 %v366
    %v661 = vunpack.c.l.b16 %v367
    %v662 = vunpack.c.l.b16 %v368
    %v663 = vunpack.c.h.b16 %v368
    %v664 = vunpack.c.l.b16 %v369
    %v665 = vunpack.c.l.b16 %v370
    %v666 = vunpack.c.h.b16 %v370
    %v667 = vunpack.c.l.b16 %v371
    %v668 = vunpack.c.l.b16 %v372
    %v669 = vunpack.c.h.b16 %v372
    %v670 = vunpack.c.l.b16 %v373
    %v671 = vunpack.c.l.b16 %v374
    %v672 = vunpack.c.h.b16 %v374
    %v673 = vunpack.c.l.b16 %v375
    %v674 = vunpack.c.l.b16 %v376
    %v675 = vunpack.c.h.b16 %v376
    %v676 = vunpack.c.l.b16 %v377
    %v677 = vunpack.c.l.b16 %v378
    %v678 = vunpack.c.h.b16 %v378
    %v679 = vunpack.c.l.b16 %v379
    %v680 = vunpack.c.l.b16 %v380
    %v681 = vunpack.c.h.b16 %v380
    %v682 = vunpack.c.l.b16 %v381
    %v683 = vunpack.c.l.b16 %v382
    %v684 = vunpack.c.h.b16 %v382
    %v685 = vunpack.c.l.b16 %v383
    %v686 = vunpack.c.l.b16 %v384
    %v687 = vunpack.c.h.b16 %v384
    %v688 = vunpack.c.l.b16 %v385
    %v689 = vunpack.c.l.b16 %v386
    %v690 = vunpack.c.h.b16 %v386
    %v691 = vunpack.c.l.b16 %v387
    %v692 = vunpack.c.l.b16 %v388
    %v693 = vunpack.c.h.b16 %v388
    %v694 = vunpack.c.l.b16 %v389
    %v695 = vunpack.c.l.b16 %v390
    %v696 = vunpack.c.h.b16 %v390
    %v697 = vunpack.c.l.b16 %v391
    %v698 = vunpack.c.l.b16 %v392
    %v699 = vunpack.c.h.b16 %v392
    %v700 = vunpack.c.l.b16 %v393
    %v701 = vunpack.c.l.b16 %v394
    %v702 = vunpack.c.h.b16 %v394
    %v703 = vunpack.c.l.b16 %v395
    %v704 = vunpack.c.l.b16 %v396
    %v705 = vunpack.c.h.b16 %v396
    %v706 = vunpack.c.l.b16 %v397
    %v707 = vunpack.c.l.b16 %v398
    %v708 = vunpack.c.h.b16 %v398
    %v709 = vunpack.c.l.b16 %v399
    %v710 = vunpack.c.l.b16 %v400
    %v711 = vunpack.c.h.b16 %v400
    %v712 = vunpack.c.l.b16 %v401
    %v713 = vunpack.c.l.b16 %v402
    %v714 = vunpack.c.h.b16 %v402
    %v715 = vunpack.c.l.b16 %v403
    %v716 = vunpack.c.l.b16 %v404
    %v717 = vunpack.c.h.b16 %v404
    %v718 = vunpack.c.l.b16 %v405
    %v719 = vunpack.c.l.b16 %v406
    %v720 = vunpack.c.h.b16 %v406
    %v721 = vunpack.c.l.b16 %v407
    %v722 = vunpack.c.l.b16 %v408
    %v723 = vunpack.c.h.b16 %v408
    %v724 = vunpack.c.l.b16 %v409
    %v725 = vunpack.c.l.b16 %v410
    %v726 = vunpack.c.h.b16 %v410
    %v727 = vunpack.c.l.b16 %v411
    %v728 = vunpack.c.l.b16 %v412
    %v729 = vunpack.c.h.b16 %v412
    %v730 = vunpack.c.l.b16 %v413
    %v731 = vunpack.c.l.b16 %v414
    %v732 = vunpack.c.h.b16 %v414
    %v733 = vunpack.c.l.b16 %v415
    %v734 = vunpack.c.l.b16 %v416
    %v735 = vunpack.c.h.b16 %v416
    %v736 = vunpack.c.l.b16 %v417
    %v737 = vunpack.c.l.b16 %v418
    %v738 = vunpack.c.h.b16 %v418
    %v739 = vunpack.c.l.b16 %v419
    %v740 = vunpack.c.l.b16 %v420
    %v741 = vunpack.c.h.b16 %v420
    %v742 = vunpack.c.l.b16 %v421
    %v743 = vunpack.c.l.b16 %v422
    %v744 = vunpack.c.h.b16 %v422
    %v745 = vunpack.c.l.b16 %v423
    %v746 = vunpack.c.l.b16 %v424
    %v747 = vunpack.c.h.b16 %v424
    %v748 = vunpack.c.l.b16 %v425
    %v749 = vunpack.c.l.b16 %v426
    %v750 = vunpack.c.h.b16 %v426
    %v751 = vunpack.c.l.b16 %v427
    %v752 = vunpack.c.l.b16 %v428
    %v753 = vunpack.c.h.b16 %v428
    %v754 = vunpack.c.l.b16 %v429
    %v755 = vunpack.c.l.b16 %v430
    %v756 = vunpack.c.h.b16 %v430
    %v757 = vunpack.c.l.b16 %v431
    %v758 = vunpack.c.l.b16 %v432
    %v759 = vunpack.c.h.b16 %v432
    %v760 = vunpack.c.l.b16 %v433
    %v761 = vunpack.c.l.b16 %v434
    %v762 = vunpack.c.h.b16 %v434
    %v763 = vunpack.c.l.b16 %v435
    %v764 = vpack.c.b16 %v575, %v572
    %v765 = vpack.c.b16 %v576, %v573
    %v766 = vpack.c.b16 %v577, %v574
    %v767 = vpack.c.b16 %v581, %v578
    %v768 = vpack.c.b16 %v582, %v579
    %v769 = vpack.c.b16 %v583, %v580
    %v770 = vpack.c.b16 %v587, %v584
    %v771 = vpack.c.b16 %v588, %v585
    %v772 = vpack.c.b16 %v589, %v586
    %v773 = vpack.c.b16 %v593, %v590
    %v774 = vpack.c.b16 %v594, %v591
    %v775 = vpack.c.b16 %v595, %v592
    %v776 = vpack.c.b16 %v599, %v596
    %v777 = vpack.c.b16 %v600, %v597
    %v778 = vpack.c.b16 %v601, %v598
    %v779 = vpack.c.b16 %v605, %v602
    %v780 = vpack.c.b16 %v606, %v603
    %v781 = vpack.c.b16 %v607, %v604
    %v782 = vpack.c.b16 %v611, %v608
    %v783 = vpack.c.b16 %v612, %v609
    %v784 = vpack.c.b16 %v613, %v610
    %v785 = vpack.c.b16 %v617, %v614
    %v786 = vpack.c.b16 %v618, %v615
    %v787 = vpack.c.b16 %v619, %v616
    %v788 = vpack.c.b16 %v623, %v620
    %v789 = vpack.c.b16 %v624, %v621
    %v790 = vpack.c.b16 %v625, %v622
    %v791 = vpack.c.b16 %v629, %v626
    %v792 = vpack.c.b16 %v630, %v627
    %v793 = vpack.c.b16 %v631, %v628
    %v794 = vpack.c.b16 %v635, %v632
    %v795 = vpack.c.b16 %v636, %v633
    %v796 = vpack.c.b16 %v637, %v634
    %v797 = vpack.c.b16 %v641, %v638
    %v798 = vpack.c.b16 %v642, %v639
    %v799 = vpack.c.b16 %v643, %v640
    %v800 = vpack.c.b16 %v647, %v644
    %v801 = vpack.c.b16 %v648, %v645
    %v802 = vpack.c.b16 %v649, %v646
    %v803 = vpack.c.b16 %v653, %v650
    %v804 = vpack.c.b16 %v654, %v651
    %v805 = vpack.c.b16 %v655, %v652
    %v806 = vpack.c.b16 %v659, %v656
    %v807 = vpack.c.b16 %v660, %v657
    %v808 = vpack.c.b16 %v661, %v658
    %v809 = vpack.c.b16 %v665, %v662
    %v810 = vpack.c.b16 %v666, %v663
    %v811 = vpack.c.b16 %v667, %v664
    %v812 = vpack.c.b16 %v671, %v668
    %v813 = vpack.c.b16 %v672, %v669
    %v814 = vpack.c.b16 %v673, %v670
    %v815 = vpack.c.b16 %v677, %v674
    %v816 = vpack.c.b16 %v678, %v675
    %v817 = vpack.c.b16 %v679, %v676
    %v818 = vpack.c.b16 %v683, %v680
    %v819 = vpack.c.b16 %v684, %v681
    %v820 = vpack.c.b16 %v685, %v682
    %v821 = vpack.c.b16 %v689, %v686
    %v822 = vpack.c.b16 %v690, %v687
    %v823 = vpack.c.b16 %v691, %v688
    %v824 = vpack.c.b16 %v695, %v692
    %v825 = vpack.c.b16 %v696, %v693
    %v826 = vpack.c.b16 %v697, %v694
    %v827 = vpack.c.b16 %v701, %v698
    %v828 = vpack.c.b16 %v702, %v699
    %v829 = vpack.c.b16 %v703, %v700
    %v830 = vpack.c.b16 %v707, %v704
    %v831 = vpack.c.b16 %v708, %v705
    %v832 = vpack.c.b16 %v709, %v706
    %v833 = vpack.c.b16 %v713, %v710
    %v834 = vpack.c.b16 %v714, %v711
    %v835 = vpack.c.b16 %v715, %v712
    %v836 = vpack.c.b16 %v719, %v716
    %v837 = vpack.c.b16 %v720, %v717
    %v838 = vpack.c.b16 %v721, %v718
    %v839 = vpack.c.b16 %v725, %v722
    %v840 = vpack.c.b16 %v726, %v723
    %v841 = vpack.c.b16 %v727, %v724
    %v842 = vpack.c.b16 %v731, %v728
    %v843 = vpack.c.b16 %v732, %v729
    %v844 = vpack.c.b16 %v733, %v730
    %v845 = vpack.c.b16 %v737, %v734
    %v846 = vpack.c.b16 %v738, %v735
    %v847 = vpack.c.b16 %v739, %v736
    %v848 = vpack.c.b16 %v743, %v740
    %v849 = vpack.c.b16 %v744, %v741
    %v850 = vpack.c.b16 %v745, %v742
    %v851 = vpack.c.b16 %v749, %v746
    %v852 = vpack.c.b16 %v750, %v747
    %v853 = vpack.c.b16 %v751, %v748
    %v854 = vpack.c.b16 %v755, %v752
    %v855 = vpack.c.b16 %v756, %v753
    %v856 = vpack.c.b16 %v757, %v754
    %v857 = vpack.c.b16 %v761, %v758
    %v858 = vpack.c.b16 %v762, %v759
    %v859 = vpack.c.b16 %v763, %v760
    %956 = vmatpush.bf16.msra.mxu0 %v785
    %957 = vmatpush.bf16.msra.mxu0 %v782
    %958 = vmatpush.bf16.msra.mxu0 %v779
    %959 = vmatpush.bf16.msra.mxu0 %v776
    %960 = vmatpush.bf16.msra.mxu0 %v773
    %961 = vmatpush.bf16.msra.mxu0 %v770
    %962 = vmatpush.bf16.msra.mxu0 %v767
    %963 = vmatpush.bf16.msra.mxu0 %v764
    %964 = vmatmul.f32.gmra.mxu0 %v304
    %v965 = vpop.f32.mrf.mxu0
    %v966 = vadd.f32 %v438, %v965
    %967 = vdwg.mxu0
    %968 = vmatpush.bf16.msra.mxu0 %v809
    %969 = vmatpush.bf16.msra.mxu0 %v806
    %970 = vmatpush.bf16.msra.mxu0 %v803
    %971 = vmatpush.bf16.msra.mxu0 %v800
    %972 = vmatpush.bf16.msra.mxu0 %v797
    %973 = vmatpush.bf16.msra.mxu0 %v794
    %974 = vmatpush.bf16.msra.mxu0 %v791
    %975 = vmatpush.bf16.msra.mxu0 %v788
    %976 = vmatmul.f32.gmra.mxu0 %v305
    %v977 = vpop.f32.mrf.mxu0
    %v978 = vadd.f32 %v966, %v977
    %979 = vdwg.mxu0
    %980 = vmatpush.bf16.msra.mxu0 %v833
    %981 = vmatpush.bf16.msra.mxu0 %v830
    %982 = vmatpush.bf16.msra.mxu0 %v827
    %983 = vmatpush.bf16.msra.mxu0 %v824
    %984 = vmatpush.bf16.msra.mxu0 %v821
    %985 = vmatpush.bf16.msra.mxu0 %v818
    %986 = vmatpush.bf16.msra.mxu0 %v815
    %987 = vmatpush.bf16.msra.mxu0 %v812
    %988 = vmatmul.f32.gmra.mxu0 %v306
    %v989 = vpop.f32.mrf.mxu0
    %v990 = vadd.f32 %v978, %v989
    %991 = vdwg.mxu0
    %992 = vmatpush.bf16.msra.mxu0 %v857
    %993 = vmatpush.bf16.msra.mxu0 %v854
    %994 = vmatpush.bf16.msra.mxu0 %v851
    %995 = vmatpush.bf16.msra.mxu0 %v848
    %996 = vmatpush.bf16.msra.mxu0 %v845
    %997 = vmatpush.bf16.msra.mxu0 %v842
    %998 = vmatpush.bf16.msra.mxu0 %v839
    %999 = vmatpush.bf16.msra.mxu0 %v836
    %1000 = vmatmul.f32.gmra.mxu0 %v307
    %v1001 = vpop.f32.mrf.mxu0
    %v1002 = vadd.f32 %v990, %v1001
    %1003 = vdwg.mxu0
    %1004 = vmatpush.bf16.msra.mxu0 %v786
    %1005 = vmatpush.bf16.msra.mxu0 %v783
    %1006 = vmatpush.bf16.msra.mxu0 %v780
    %1007 = vmatpush.bf16.msra.mxu0 %v777
    %1008 = vmatpush.bf16.msra.mxu0 %v774
    %1009 = vmatpush.bf16.msra.mxu0 %v771
    %1010 = vmatpush.bf16.msra.mxu0 %v768
    %1011 = vmatpush.bf16.msra.mxu0 %v765
    %1012 = vmatmul.f32.gmra.mxu0 %v304
    %v1013 = vpop.f32.mrf.mxu0
    %v1014 = vadd.f32 %v439, %v1013
    %1015 = vdwg.mxu0
    %1016 = vmatpush.bf16.msra.mxu0 %v810
    %1017 = vmatpush.bf16.msra.mxu0 %v807
    %1018 = vmatpush.bf16.msra.mxu0 %v804
    %1019 = vmatpush.bf16.msra.mxu0 %v801
    %1020 = vmatpush.bf16.msra.mxu0 %v798
    %1021 = vmatpush.bf16.msra.mxu0 %v795
    %1022 = vmatpush.bf16.msra.mxu0 %v792
    %1023 = vmatpush.bf16.msra.mxu0 %v789
    %1024 = vmatmul.f32.gmra.mxu0 %v305
    %v1025 = vpop.f32.mrf.mxu0
    %v1026 = vadd.f32 %v1014, %v1025
    %1027 = vdwg.mxu0
    %1028 = vmatpush.bf16.msra.mxu0 %v834
    %1029 = vmatpush.bf16.msra.mxu0 %v831
    %1030 = vmatpush.bf16.msra.mxu0 %v828
    %1031 = vmatpush.bf16.msra.mxu0 %v825
    %1032 = vmatpush.bf16.msra.mxu0 %v822
    %1033 = vmatpush.bf16.msra.mxu0 %v819
    %1034 = vmatpush.bf16.msra.mxu0 %v816
    %1035 = vmatpush.bf16.msra.mxu0 %v813
    %1036 = vmatmul.f32.gmra.mxu0 %v306
    %v1037 = vpop.f32.mrf.mxu0
    %v1038 = vadd.f32 %v1026, %v1037
    %1039 = vdwg.mxu0
    %1040 = vmatpush.bf16.msra.mxu0 %v858
    %1041 = vmatpush.bf16.msra.mxu0 %v855
    %1042 = vmatpush.bf16.msra.mxu0 %v852
    %1043 = vmatpush.bf16.msra.mxu0 %v849
    %1044 = vmatpush.bf16.msra.mxu0 %v846
    %1045 = vmatpush.bf16.msra.mxu0 %v843
    %1046 = vmatpush.bf16.msra.mxu0 %v840
    %1047 = vmatpush.bf16.msra.mxu0 %v837
    %1048 = vmatmul.f32.gmra.mxu0 %v307
    %v1049 = vpop.f32.mrf.mxu0
    %v1050 = vadd.f32 %v1038, %v1049
    %1051 = vdwg.mxu0
    %1052 = vmatpush.bf16.msra.mxu0 %v787
    %1053 = vmatpush.bf16.msra.mxu0 %v784
    %1054 = vmatpush.bf16.msra.mxu0 %v781
    %1055 = vmatpush.bf16.msra.mxu0 %v778
    %1056 = vmatpush.bf16.msra.mxu0 %v775
    %1057 = vmatpush.bf16.msra.mxu0 %v772
    %1058 = vmatpush.bf16.msra.mxu0 %v769
    %1059 = vmatpush.bf16.msra.mxu0 %v766
    %1060 = vmatmul.f32.gmra.mxu0 %v304
    %v1061 = vpop.f32.mrf.mxu0
    %v1062 = vadd.f32 %v440, %v1061
    %1063 = vdwg.mxu0
    %1064 = vmatpush.bf16.msra.mxu0 %v811
    %1065 = vmatpush.bf16.msra.mxu0 %v808
    %1066 = vmatpush.bf16.msra.mxu0 %v805
    %1067 = vmatpush.bf16.msra.mxu0 %v802
    %1068 = vmatpush.bf16.msra.mxu0 %v799
    %1069 = vmatpush.bf16.msra.mxu0 %v796
    %1070 = vmatpush.bf16.msra.mxu0 %v793
    %1071 = vmatpush.bf16.msra.mxu0 %v790
    %1072 = vmatmul.f32.gmra.mxu0 %v305
    %v1073 = vpop.f32.mrf.mxu0
    %v1074 = vadd.f32 %v1062, %v1073
    %1075 = vdwg.mxu0
    %1076 = vmatpush.bf16.msra.mxu0 %v835
    %1077 = vmatpush.bf16.msra.mxu0 %v832
    %1078 = vmatpush.bf16.msra.mxu0 %v829
    %1079 = vmatpush.bf16.msra.mxu0 %v826
    %1080 = vmatpush.bf16.msra.mxu0 %v823
    %1081 = vmatpush.bf16.msra.mxu0 %v820
    %1082 = vmatpush.bf16.msra.mxu0 %v817
    %1083 = vmatpush.bf16.msra.mxu0 %v814
    %1084 = vmatmul.f32.gmra.mxu0 %v306
    %v1085 = vpop.f32.mrf.mxu0
    %v1086 = vadd.f32 %v1074, %v1085
    %1087 = vdwg.mxu0
    %1088 = vmatpush.bf16.msra.mxu0 %v859
    %1089 = vmatpush.bf16.msra.mxu0 %v856
    %1090 = vmatpush.bf16.msra.mxu0 %v853
    %1091 = vmatpush.bf16.msra.mxu0 %v850
    %1092 = vmatpush.bf16.msra.mxu0 %v847
    %1093 = vmatpush.bf16.msra.mxu0 %v844
    %1094 = vmatpush.bf16.msra.mxu0 %v841
    %1095 = vmatpush.bf16.msra.mxu0 %v838
    %1096 = vmatmul.f32.gmra.mxu0 %v307
    %v1097 = vpop.f32.mrf.mxu0
    %v1098 = vadd.f32 %v1086, %v1097
    %1099 = vdwg.mxu0
    %v1100 = vmax.f32 %v1002, 0.0
    %v1101 = vmax.f32 %v1050, 0.0
    %v1102 = vmax.f32 %v1098, 0.0
    %v1103 = vld [vmem:[#allocation13] sm:$0xf]
    %v1104 = vld [vmem:[#allocation13 + $0x4] sm:$0xf]
    %v1105 = vld [vmem:[#allocation13 + $0x8] sm:$0xf]
    %v1106 = vld [vmem:[#allocation13 + $0xc] sm:$0xf]
    %v1107 = vld [vmem:[#allocation13 + $0x10] sm:$0xf]
    %v1108 = vld [vmem:[#allocation13 + $0x14] sm:$0xf]
    %v1109 = vld [vmem:[#allocation13 + $0x18] sm:$0xf]
    %v1110 = vld [vmem:[#allocation13 + $0x1c] sm:$0xf]
    %v1111 = vld [vmem:[#allocation13 + $0x20] sm:$0xf]
    %v1112 = vld [vmem:[#allocation13 + $0x24] sm:$0xf]
    %v1113 = vld [vmem:[#allocation13 + $0x28] sm:$0xf]
    %v1114 = vld [vmem:[#allocation13 + $0x2c] sm:$0xf]
    %v1115 = vld [vmem:[#allocation13 + $0x30] sm:$0xf]
    %v1116 = vld [vmem:[#allocation13 + $0x34] sm:$0xf]
    %v1117 = vld [vmem:[#allocation13 + $0x38] sm:$0xf]
    %v1118 = vld [vmem:[#allocation13 + $0x3c] sm:$0xf]
    %v1119 = vld [vmem:[#allocation13 + $0x40] sm:$0xf]
    %v1120 = vld [vmem:[#allocation13 + $0x44] sm:$0xf]
    %v1121 = vld [vmem:[#allocation13 + $0x48] sm:$0xf]
    %v1122 = vld [vmem:[#allocation13 + $0x4c] sm:$0xf]
    %v1123 = vld [vmem:[#allocation13 + $0x50] sm:$0xf]
    %v1124 = vld [vmem:[#allocation13 + $0x54] sm:$0xf]
    %v1125 = vld [vmem:[#allocation13 + $0x58] sm:$0xf]
    %v1126 = vld [vmem:[#allocation13 + $0x5c] sm:$0xf]
    %v1127 = vld [vmem:[#allocation13 + $0x60] sm:$0xf]
    %v1128 = vld [vmem:[#allocation13 + $0x64] sm:$0xf]
    %v1129 = vld [vmem:[#allocation13 + $0x68] sm:$0xf]
    %v1130 = vld [vmem:[#allocation13 + $0x6c] sm:$0xf]
    %v1131 = vld [vmem:[#allocation13 + $0x70] sm:$0xf]
    %v1132 = vld [vmem:[#allocation13 + $0x74] sm:$0xf]
    %v1133 = vld [vmem:[#allocation13 + $0x78] sm:$0xf]
    %v1134 = vld [vmem:[#allocation13 + $0x7c] sm:$0xf]
    %v1135 = vld [vmem:[#allocation13 + $0x80] sm:$0xf]
    %v1136 = vld [vmem:[#allocation13 + $0x84] sm:$0xf]
    %v1137 = vld [vmem:[#allocation13 + $0x88] sm:$0xf]
    %v1138 = vld [vmem:[#allocation13 + $0x8c] sm:$0xf]
    %v1139 = vld [vmem:[#allocation13 + $0x90] sm:$0xf]
    %v1140 = vld [vmem:[#allocation13 + $0x94] sm:$0xf]
    %v1141 = vld [vmem:[#allocation13 + $0x98] sm:$0xf]
    %v1142 = vld [vmem:[#allocation13 + $0x9c] sm:$0xf]
    %v1143 = vld [vmem:[#allocation13 + $0xa0] sm:$0xf]
    %v1144 = vld [vmem:[#allocation13 + $0xa4] sm:$0xf]
    %v1145 = vld [vmem:[#allocation13 + $0xa8] sm:$0xf]
    %v1146 = vld [vmem:[#allocation13 + $0xac] sm:$0xf]
    %v1147 = vld [vmem:[#allocation13 + $0xb0] sm:$0xf]
    %v1148 = vld [vmem:[#allocation13 + $0xb4] sm:$0xf]
    %v1149 = vld [vmem:[#allocation13 + $0xb8] sm:$0xf]
    %v1150 = vld [vmem:[#allocation13 + $0xbc] sm:$0xf]
    %v1151 = vld [vmem:[%s8] sm:$0x1]
    %v1153 = vperm.slane %v1151, 0
    %v1203 = vunpack.c.l.b16 %v1103
    %v1204 = vunpack.c.l.b16 %v1104
    %v1205 = vunpack.c.l.b16 %v1105
    %v1206 = vunpack.c.l.b16 %v1106
    %v1207 = vunpack.c.l.b16 %v1107
    %v1208 = vunpack.c.l.b16 %v1108
    %v1209 = vunpack.c.l.b16 %v1109
    %v1210 = vunpack.c.l.b16 %v1110
    %v1211 = vunpack.c.l.b16 %v1111
    %v1212 = vunpack.c.l.b16 %v1112
    %v1213 = vunpack.c.l.b16 %v1113
    %v1214 = vunpack.c.l.b16 %v1114
    %v1215 = vunpack.c.l.b16 %v1115
    %v1216 = vunpack.c.l.b16 %v1116
    %v1217 = vunpack.c.l.b16 %v1117
    %v1218 = vunpack.c.l.b16 %v1118
    %v1219 = vunpack.c.l.b16 %v1119
    %v1220 = vunpack.c.l.b16 %v1120
    %v1221 = vunpack.c.l.b16 %v1121
    %v1222 = vunpack.c.l.b16 %v1122
    %v1223 = vunpack.c.l.b16 %v1123
    %v1224 = vunpack.c.l.b16 %v1124
    %v1225 = vunpack.c.l.b16 %v1125
    %v1226 = vunpack.c.l.b16 %v1126
    %v1227 = vunpack.c.l.b16 %v1127
    %v1228 = vunpack.c.l.b16 %v1128
    %v1229 = vunpack.c.l.b16 %v1129
    %v1230 = vunpack.c.l.b16 %v1130
    %v1231 = vunpack.c.l.b16 %v1131
    %v1232 = vunpack.c.l.b16 %v1132
    %v1233 = vunpack.c.l.b16 %v1133
    %v1234 = vunpack.c.l.b16 %v1134
    %v1235 = vunpack.c.l.b16 %v1135
    %v1236 = vunpack.c.l.b16 %v1136
    %v1237 = vunpack.c.l.b16 %v1137
    %v1238 = vunpack.c.l.b16 %v1138
    %v1239 = vunpack.c.l.b16 %v1139
    %v1240 = vunpack.c.l.b16 %v1140
    %v1241 = vunpack.c.l.b16 %v1141
    %v1242 = vunpack.c.l.b16 %v1142
    %v1243 = vunpack.c.l.b16 %v1143
    %v1244 = vunpack.c.l.b16 %v1144
    %v1245 = vunpack.c.l.b16 %v1145
    %v1246 = vunpack.c.l.b16 %v1146
    %v1247 = vunpack.c.l.b16 %v1147
    %v1248 = vunpack.c.l.b16 %v1148
    %v1249 = vunpack.c.l.b16 %v1149
    %v1250 = vunpack.c.l.b16 %v1150
    %v1251 = vpack.c.b16 %v1204, %v1203
    %v1252 = vpack.c.b16 %v1206, %v1205
    %v1253 = vpack.c.b16 %v1208, %v1207
    %v1254 = vpack.c.b16 %v1210, %v1209
    %v1255 = vpack.c.b16 %v1212, %v1211
    %v1256 = vpack.c.b16 %v1214, %v1213
    %v1257 = vpack.c.b16 %v1216, %v1215
    %v1258 = vpack.c.b16 %v1218, %v1217
    %v1259 = vpack.c.b16 %v1220, %v1219
    %v1260 = vpack.c.b16 %v1222, %v1221
    %v1261 = vpack.c.b16 %v1224, %v1223
    %v1262 = vpack.c.b16 %v1226, %v1225
    %v1263 = vpack.c.b16 %v1228, %v1227
    %v1264 = vpack.c.b16 %v1230, %v1229
    %v1265 = vpack.c.b16 %v1232, %v1231
    %v1266 = vpack.c.b16 %v1234, %v1233
    %v1267 = vpack.c.b16 %v1236, %v1235
    %v1268 = vpack.c.b16 %v1238, %v1237
    %v1269 = vpack.c.b16 %v1240, %v1239
    %v1270 = vpack.c.b16 %v1242, %v1241
    %v1271 = vpack.c.b16 %v1244, %v1243
    %v1272 = vpack.c.b16 %v1246, %v1245
    %v1273 = vpack.c.b16 %v1248, %v1247
    %v1274 = vpack.c.b16 %v1250, %v1249
    %1299 = vmatpush.bf16.msra.mxu0 %v1258
    %1300 = vmatpush.bf16.msra.mxu0 %v1257
    %1301 = vmatpush.bf16.msra.mxu0 %v1256
    %1302 = vmatpush.bf16.msra.mxu0 %v1255
    %1303 = vmatpush.bf16.msra.mxu0 %v1254
    %1304 = vmatpush.bf16.msra.mxu0 %v1253
    %1305 = vmatpush.bf16.msra.mxu0 %v1252
    %1306 = vmatpush.bf16.msra.mxu0 %v1251
    %1307 = vmatmul.f32.gmra.mxu0 %v1100
    %v1308 = vpop.f32.mrf.mxu0
    %v1309 = vadd.f32 %v1153, %v1308
    %1310 = vdwg.mxu0
    %1311 = vmatpush.bf16.msra.mxu0 %v1266
    %1312 = vmatpush.bf16.msra.mxu0 %v1265
    %1313 = vmatpush.bf16.msra.mxu0 %v1264
    %1314 = vmatpush.bf16.msra.mxu0 %v1263
    %1315 = vmatpush.bf16.msra.mxu0 %v1262
    %1316 = vmatpush.bf16.msra.mxu0 %v1261
    %1317 = vmatpush.bf16.msra.mxu0 %v1260
    %1318 = vmatpush.bf16.msra.mxu0 %v1259
    %1319 = vmatmul.f32.gmra.mxu0 %v1101
    %v1320 = vpop.f32.mrf.mxu0
    %v1321 = vadd.f32 %v1309, %v1320
    %1322 = vdwg.mxu0
    %1323 = vmatpush.bf16.msra.mxu0 %v1274
    %1324 = vmatpush.bf16.msra.mxu0 %v1273
    %1325 = vmatpush.bf16.msra.mxu0 %v1272
    %1326 = vmatpush.bf16.msra.mxu0 %v1271
    %1327 = vmatpush.bf16.msra.mxu0 %v1270
    %1328 = vmatpush.bf16.msra.mxu0 %v1269
    %1329 = vmatpush.bf16.msra.mxu0 %v1268
    %1330 = vmatpush.bf16.msra.mxu0 %v1267
    %1331 = vmatmul.f32.gmra.mxu0 %v1102
    %v1332 = vpop.f32.mrf.mxu0
    %v1333 = vadd.f32 %v1321, %v1332
    %1334 = vdwg.mxu0
    %1335 = vst [vmem:[#allocation14] sm:$0xff] %v1333
    // Predicated region
    $region66: #{tpu_custom_call.1} parent=1 // pred_check
      _
    $region67: #{tpu_custom_call.1} parent=1 // pred_check_branch
      %1337 = sbr.rel (0) target = $region69
    $region68: #{tpu_custom_call.1} parent=1 // pred_region
      %1339 = vsyncadd [#allocation4], 0
      %s1341 = sshll.u32 [#allocation14], 4
      %s1342 = int_to_ptr.vmem [resolvable:$true] %s1341
      %s1343 = sshll.u32 %s9, 4
      %s1344 = int_to_ptr.hbm [resolvable:$true] %s1343
      %1346 = dma.vmem_to_hbm [thread:$0]  %s1342, 128, %s1344, [#allocation4]
    $region69: #{tpu_custom_call.1} parent=1 // pred_fallthru
      _
    // Predicated region
    $region70: #{tpu_custom_call.1} parent=1 // pred_check
      _
    $region71: #{tpu_custom_call.1} parent=1 // pred_check_branch
      %1348 = sbr.rel (0) target = $region73
    $region72: #{tpu_custom_call.1} parent=1 // pred_region
      %1350 = dma.done [#allocation4], 128
    $region73: #{tpu_custom_call.1} parent=1 // pred_fallthru
      _
    %1351 = vsyncpa [#allocation3], 1
    %1352 = vsyncpa [#allocation6], 1
    %1353 = vsyncpa [#allocation9], 1
    %1354 = vsyncpa [#allocation12], 1
    %1355 = vsyncpa [#allocation4], 1

</llo_original>
